<compile_context>
chip_gen: v7x
topology: tpu7x:2x2x1
jax: 0.10.0
libtpu: 0.0.40
codegen_flags: <defaults>
</compile_context>

<pallas_src>
import jax
import jax.numpy as jnp
from jax.experimental import pallas as pl
from jax.experimental.pallas import tpu as pltpu


def _round_up(n: int, m: int) -> int:
    return ((n + m - 1) // m) * m


# --------------------------------------------------------------------------- #
# Kernel
# --------------------------------------------------------------------------- #
def _postnet_kernel(x_ref, wd_ref, bd_ref, wu_ref, bu_ref, o_ref):
    # x tile in native dtype; MXU operands are cast to the stored weight dtype
    # (no-op for f32, bf16 full-rate path when bf16 weights are used).
    x = x_ref[...]

    # down projection (MXU, f32 accumulate) + bias + ReLU in f32 (VPU)
    h = jnp.dot(x.astype(wd_ref.dtype), wd_ref[...],
                preferred_element_type=jnp.float32)
    h = jnp.maximum(h + bd_ref[...].astype(jnp.float32), 0.0)

    # up projection (MXU, f32 accumulate) + bias in f32
    y = jnp.dot(h.astype(wu_ref.dtype), wu_ref[...],
                preferred_element_type=jnp.float32)
    y = y + bu_ref[...].astype(jnp.float32)

    # residual add; avoid a full-tile f32 temporary of x when x is sub-32-bit
    if x.dtype == jnp.float32:
        o_ref[...] = (x + y).astype(o_ref.dtype)
    else:
        o_ref[...] = (x + y.astype(x.dtype)).astype(o_ref.dtype)


# --------------------------------------------------------------------------- #
# Parameter preparation (one-time; hoist out of the per-call path)
# --------------------------------------------------------------------------- #
def prepare_postnet_params(w_down, b_down, w_up, b_up, *, weight_dtype=None):
    """Pad the mid dim of the (small) weight/bias tensors to a multiple of 128
    (exact: padded columns/rows are zero) and optionally cast weights to
    `weight_dtype` (e.g. jnp.bfloat16).  Call once, reuse across calls."""
    in_size, mid_size = w_down.shape
    mid_p = _round_up(mid_size, 128)

    wd, bd, wu, bu = w_down, b_down, w_up, b_up
    if weight_dtype is not None:
        wd = wd.astype(weight_dtype)
        wu = wu.astype(weight_dtype)
    if mid_p != mid_size:
        wd = jnp.pad(wd, ((0, 0), (0, mid_p - mid_size)))
        bd = jnp.pad(bd, (0, mid_p - mid_size))
        wu = jnp.pad(wu, ((0, mid_p - mid_size), (0, 0)))
    return wd, bd.reshape(1, mid_p), wu, bu.reshape(1, in_size)


def _resident_spec(shape):
    """Weight/bias spec: constant index_map (DMA'd once). Single-buffer it via
    pipeline_mode=pl.Buffered(1) when supported to halve resident VMEM."""
    idx = lambda i: (0, 0)
    buffered = getattr(pl, "Buffered", None)
    if buffered is not None:
        try:
            return pl.BlockSpec(shape, idx, pipeline_mode=buffered(1))
        except TypeError:
            pass
    return pl.BlockSpec(shape, idx)


# --------------------------------------------------------------------------- #
# Wrapper
# --------------------------------------------------------------------------- #
def residual_postnet_prepared(x, wd, bd, wu, bu, *, tm=512):
    """x: (..., in_size). wd/bd/wu/bu from prepare_postnet_params."""
    in_size = x.shape[-1]
    mid_p = wd.shape[1]
    assert wd.shape[0] == in_size and wu.shape == (mid_p, in_size)

    orig_shape = x.shape
    x2 = x.reshape(-1, in_size)          # metadata-only reshape, no HBM pass
    M = x2.shape[0]

    # Row tile: multiple of 8, capped at ceil(M/2) so the parallel grid has
    # >=2 steps (both v7x TensorCores get work).  Ragged last block is fine:
    # rows are independent and OOB output writes are masked by Pallas.
    tm = max(8, _round_up(tm, 8))
    tm_cap = _round_up(-(-M // 2), 8) if M > 8 else _round_up(M, 8)
    tm_eff = min(tm, tm_cap)

    # --- generation-aware VMEM budget -------------------------------------
    x_b = x2.dtype.itemsize
    w_b = wd.dtype.itemsize

    def _needed(t):
        tiles = 2 * t * in_size * x_b + 2 * t * in_size * x_b      # x + out (double buffered)
        weights = 2 * (in_size * mid_p) * w_b                      # wd + wu (single buffered)
        biases = 8 * mid_p * bd.dtype.itemsize + 8 * in_size * bu.dtype.itemsize
        interm = t * mid_p * 4 + 2 * t * in_size * 4               # f32 h, y temporaries
        return tiles + weights + biases + interm

    try:
        cap = int(pltpu.get_tpu_info().vmem_capacity_bytes) * 3 // 4  # ~48 MiB v7x, ~96 MiB v5e/v6e
    except Exception:
        cap = 48 * 1024 * 1024

    while _needed(tm_eff) > cap and tm_eff > 128:
        tm_eff = max(128, _round_up(tm_eff // 2, 8))

    vmem_limit = int(min(cap, max(2 * _needed(tm_eff), 32 * 1024 * 1024)))
    grid = (pl.cdiv(M, tm_eff),)

    cost = pl.CostEstimate(
        flops=4 * M * in_size * mid_p + M * (mid_p + 2 * in_size),
        transcendentals=0,
        bytes_accessed=(2 * M * in_size * x_b
                        + 2 * in_size * mid_p * w_b
                        + mid_p * bd.dtype.itemsize + in_size * bu.dtype.itemsize),
    )

    out = pl.pallas_call(
        _postnet_kernel,
        out_shape=jax.ShapeDtypeStruct((M, in_size), x.dtype),
        grid_spec=pltpu.PrefetchScalarGridSpec(
            num_scalar_prefetch=0,
            grid=grid,
            in_specs=[
                pl.BlockSpec((tm_eff, in_size), lambda i: (i, 0)),   # x tile
                _resident_spec((in_size, mid_p)),                    # W_down
                _resident_spec((1, mid_p)),                          # b_down
                _resident_spec((mid_p, in_size)),                    # W_up
                _resident_spec((1, in_size)),                        # b_up
            ],
            out_specs=pl.BlockSpec((tm_eff, in_size), lambda i: (i, 0)),
        ),
        compiler_params=pltpu.CompilerParams(
            dimension_semantics=("parallel",),
            vmem_limit_bytes=vmem_limit,
        ),
        cost_estimate=cost,
    )(x2, wd, bd, wu, bu)

    return out.reshape(orig_shape)


def residual_postnet(x, w_down, b_down, w_up, b_up, *, tm=512, weight_dtype=None):
    """Convenience wrapper (prepares params per call). For repeated calls,
    call prepare_postnet_params once and use residual_postnet_prepared."""
    params = prepare_postnet_params(w_down, b_down, w_up, b_up,
                                    weight_dtype=weight_dtype)
    return residual_postnet_prepared(x, *params, tm=tm)


# --------------------------------------------------------------------------- #
# Param init mimicking nn.Linear (weights pre-transposed to (in, out))
# --------------------------------------------------------------------------- #
def init_params(key, in_size, mid_size, dtype=jnp.float32):
    k1, k2, k3, k4 = jax.random.split(key, 4)
    bd_lim = 1.0 / jnp.sqrt(in_size)
    bu_lim = 1.0 / jnp.sqrt(mid_size)
    w_down = jax.random.uniform(k1, (in_size, mid_size), dtype, -bd_lim, bd_lim)
    b_down = jax.random.uniform(k2, (mid_size,), dtype, -bd_lim, bd_lim)
    w_up = jax.random.uniform(k3, (mid_size, in_size), dtype, -bu_lim, bu_lim)
    b_up = jax.random.uniform(k4, (in_size,), dtype, -bu_lim, bu_lim)
    return w_down, b_down, w_up, b_up


if __name__ == "__main__":
    key = jax.random.PRNGKey(0)
    kx, kp, kx2 = jax.random.split(key, 3)

    batch, seq, in_size, mid_size = 2, 8, 32, 16
    x = jax.random.normal(kx, (batch, seq, in_size), jnp.float32)
    w_down, b_down, w_up, b_up = init_params(kp, in_size, mid_size)

    def reference(inp):
        return inp + (jnp.maximum(inp @ w_down + b_down, 0.0) @ w_up + b_up)

    # one-time param prep (mid padded to 128; f32 kept for exact comparison)
    params = prepare_postnet_params(w_down, b_down, w_up, b_up)

    # small case (2-step parallel grid, full-array-dim last block, no padding of x)
    out = residual_postnet_prepared(x, *params)
    out = jax.block_until_ready(out)
    assert out.shape == x.shape
    assert jnp.allclose(out, reference(x), atol=1e-5, rtol=1e-5), "mismatch vs reference"

    # ragged-last-block / multi-step parallel grid path (M=300 not a multiple of tm)
    x_big = jax.random.normal(kx2, (3, 100, in_size), jnp.float32)
    out_big = residual_postnet(x_big, w_down, b_down, w_up, b_up, tm=128)
    out_big = jax.block_until_ready(out_big)
    assert out_big.shape == x_big.shape
    assert jnp.allclose(out_big, reference(x_big), atol=1e-5, rtol=1e-5), "mismatch vs reference (tail)"

    print("KERNEL_OK")
</pallas_src>

<mosaic_0001>
module attributes {stable_mosaic.version = 11 : i64} {
  func.func @_postnet_kernel(%arg0: i32, %arg1: memref<8x32xf32, #tpu.memory_space<vmem>>, %arg2: memref<32x128xf32, #tpu.memory_space<vmem>>, %arg3: memref<1x128xf32, #tpu.memory_space<vmem>>, %arg4: memref<128x32xf32, #tpu.memory_space<vmem>>, %arg5: memref<1x32xf32, #tpu.memory_space<vmem>>, %arg6: memref<8x32xf32, #tpu.memory_space<vmem>>) attributes {dimension_semantics = [#tpu.dimension_semantics<parallel>], iteration_bounds = array<i64: 2>, scalar_prefetch = 0 : i64, scratch_operands = 0 : i64, tpu.core_type = #tpu.core_type<tc>, window_params = [{transform_indices = @transform_0, window_bounds = array<i64: 8, 32>}, {pipeline_mode = #tpu.pipeline_mode<synchronous>, transform_indices = @transform_1, window_bounds = array<i64: 32, 128>}, {pipeline_mode = #tpu.pipeline_mode<synchronous>, transform_indices = @transform_2, window_bounds = array<i64: 1, 128>}, {pipeline_mode = #tpu.pipeline_mode<synchronous>, transform_indices = @transform_3, window_bounds = array<i64: 128, 32>}, {pipeline_mode = #tpu.pipeline_mode<synchronous>, transform_indices = @transform_4, window_bounds = array<i64: 1, 32>}, {transform_indices = @transform_5, window_bounds = array<i64: 8, 32>}]} {
    %c0 = arith.constant 0 : index
    %c0_0 = arith.constant 0 : index
    %0 = vector.load %arg1[%c0, %c0_0] : memref<8x32xf32, #tpu.memory_space<vmem>>, vector<8x32xf32>
    %c0_1 = arith.constant 0 : index
    %c0_2 = arith.constant 0 : index
    %1 = vector.load %arg2[%c0_1, %c0_2] : memref<32x128xf32, #tpu.memory_space<vmem>>, vector<32x128xf32>
    %cst = arith.constant dense<0.000000e+00> : vector<8x128xf32>
    %2 = tpu.matmul %0, %1, %cst {dimension_numbers = #tpu.dot_dimension_numbers<[1], [0], [0], [1], [0, 0, 1, 1], [], []>} : vector<8x32xf32>, vector<32x128xf32>, vector<8x128xf32> -> vector<8x128xf32>
    %c0_3 = arith.constant 0 : index
    %c0_4 = arith.constant 0 : index
    %3 = vector.load %arg3[%c0_3, %c0_4] : memref<1x128xf32, #tpu.memory_space<vmem>>, vector<1x128xf32>
    %4 = vector.broadcast %3 : vector<1x128xf32> to vector<8x128xf32>
    %5 = arith.addf %2, %4 : vector<8x128xf32>
    %cst_5 = arith.constant 0.000000e+00 : f32
    %6 = vector.broadcast %cst_5 : f32 to vector<8x128xf32>
    %7 = arith.maximumf %5, %6 : vector<8x128xf32>
    %c0_6 = arith.constant 0 : index
    %c0_7 = arith.constant 0 : index
    %8 = vector.load %arg4[%c0_6, %c0_7] : memref<128x32xf32, #tpu.memory_space<vmem>>, vector<128x32xf32>
    %cst_8 = arith.constant dense<0.000000e+00> : vector<8x32xf32>
    %9 = tpu.matmul %7, %8, %cst_8 {dimension_numbers = #tpu.dot_dimension_numbers<[1], [0], [0], [1], [0, 0, 1, 1], [], []>} : vector<8x128xf32>, vector<128x32xf32>, vector<8x32xf32> -> vector<8x32xf32>
    %c0_9 = arith.constant 0 : index
    %c0_10 = arith.constant 0 : index
    %10 = vector.load %arg5[%c0_9, %c0_10] : memref<1x32xf32, #tpu.memory_space<vmem>>, vector<1x32xf32>
    %11 = vector.broadcast %10 : vector<1x32xf32> to vector<8x32xf32>
    %12 = arith.addf %9, %11 : vector<8x32xf32>
    %13 = arith.addf %0, %12 : vector<8x32xf32>
    %c0_11 = arith.constant 0 : index
    %c0_12 = arith.constant 0 : index
    %14 = vector.load %arg6[%c0_11, %c0_12] : memref<8x32xf32, #tpu.memory_space<vmem>>, vector<8x32xf32>
    tpu.vector_store %arg6[%c0_11, %c0_12], %13 {strides = array<i32>} : memref<8x32xf32, #tpu.memory_space<vmem>>, vector<8x32xf32>,
    return
  }
  func.func @transform_0(%arg0: i32) -> (i32, i32) {
    %c0_i32 = arith.constant 0 : i32
    %c0_i32_0 = arith.constant 0 : i32
    return %arg0, %c0_i32 : i32, i32
  }
  func.func @transform_1(%arg0: i32) -> (i32, i32) {
    %c0_i32 = arith.constant 0 : i32
    %c0_i32_0 = arith.constant 0 : i32
    %c0_i32_1 = arith.constant 0 : i32
    return %c0_i32, %c0_i32_0 : i32, i32
  }
  func.func @transform_2(%arg0: i32) -> (i32, i32) {
    %c0_i32 = arith.constant 0 : i32
    %c0_i32_0 = arith.constant 0 : i32
    %c0_i32_1 = arith.constant 0 : i32
    return %c0_i32, %c0_i32_0 : i32, i32
  }
  func.func @transform_3(%arg0: i32) -> (i32, i32) {
    %c0_i32 = arith.constant 0 : i32
    %c0_i32_0 = arith.constant 0 : i32
    %c0_i32_1 = arith.constant 0 : i32
    return %c0_i32, %c0_i32_0 : i32, i32
  }
  func.func @transform_4(%arg0: i32) -> (i32, i32) {
    %c0_i32 = arith.constant 0 : i32
    %c0_i32_0 = arith.constant 0 : i32
    %c0_i32_1 = arith.constant 0 : i32
    return %c0_i32, %c0_i32_0 : i32, i32
  }
  func.func @transform_5(%arg0: i32) -> (i32, i32) {
    %c0_i32 = arith.constant 0 : i32
    %c0_i32_0 = arith.constant 0 : i32
    return %arg0, %c0_i32 : i32, i32
  }
}

</mosaic_0001>

<llo_original>
// kernel: tpu_custom_call.1
$region0: #{tpu_custom_call.1}
  #allocation0 [shape = 'u32[]', space=smem, size = 0x4, offset = 0x4, fixed_abs, tag = 'smem constant byte address 0x4 - core index']
  #allocation1 [shape = 'u32[144,128]{1,0:T(1,128)}', space=vmem, size = 0x12000, scoped, tag = 'internal scratch']
  %s0 = inlined_call_operand.vmem [shape: f32[16,32], index: 0, kind: input, shape index: {}]
  %s1 = inlined_call_operand.vmem [shape: f32[32,128], index: 1, kind: input, shape index: {}]
  %s2 = inlined_call_operand.vmem [shape: f32[1,128], index: 2, kind: input, shape index: {}]
  %s3 = inlined_call_operand.vmem [shape: f32[128,32], index: 3, kind: input, shape index: {}]
  %s4 = inlined_call_operand.vmem [shape: f32[1,32], index: 4, kind: input, shape index: {}]
  %s5 = inlined_call_operand.hbm [shape: f32[16,32], index: 5, kind: output, shape index: {}]
  %s6 = sld [smem:[#allocation0]]
  $region53: #{tpu_custom_call.1} parent=0
    _
  %s8 = ssub.s32 1, %s6
  %s9 = scalar_select 0, %s8, %s6
  $region1: #{tpu_custom_call.1} parent=0
    #allocation2 [shape = 'u8[8192]{0}', space=vmem, size = 0x2000, scoped, tag = 'output window, operand 0']
    #allocation3 [shape = 's32[2]{0}', space=sflag, size = 0x8, scoped, tag = 'scoped memory for tpu_custom_call.1']
    %10 = vsyncpa [#allocation3], 0
    %s11 = scalar_lea.sflag [#allocation3], 1
    %12 = vsyncpa %s11, 0
    loop: start=0, step=1, limit=4
    $region2: #{tpu_custom_call.1} parent=1 // loop_pre_header
      _
    $region3: #{tpu_custom_call.1} parent=1 // loop_header
      %s14 = sphi 0, %s18
      %p15 = scmp.ge.s32.totalorder %s14, 4
      %s24 = sphi 0, %s26
      %s27 = sphi 0, %s24
      %s28 = sphi 0, %s27
      %s44 = sphi 0, %s28
      %s48 = sphi 0, %s48
      %s50 = sphi 0, %s48
      %s51 = sphi 0, %s50
      %s65 = sphi 0, %s51
      %s69 = sphi 0, %s69
      %s71 = sphi 0, %s69
      %s72 = sphi 0, %s71
      %s86 = sphi 0, %s72
      %s90 = sphi 0, %s90
      %s92 = sphi 0, %s90
      %s93 = sphi 0, %s92
      %s107 = sphi 0, %s93
      %s111 = sphi 0, %s111
      %s113 = sphi 0, %s111
      %s114 = sphi 0, %s113
      %s128 = sphi 0, %s114
      %s134 = sphi 0, %s136
      %s137 = sphi 0, %s134
      %s138 = sphi 0, %s137
      %s154 = sphi 0, %s138
    $region4: #{tpu_custom_call.1} parent=1 // loop_header_branch
      %17 = sbr.rel (%p15) target = $region8
    $region5: #{tpu_custom_call.1} parent=1 // loop_body
      %s19 = ssub.s32 %s14, 1
      %s20 = ssub.s32 %s14, 2
      %s21 = sadd.s32 %s14, 1
      %s22 = ssub.s32 %s14, %s21
      %p23 = scmp.eq.s32.totalorder %s22, 0
      %s25 = sadd.s32 %s24, 1
      %s26 = scalar_select %p23, %s24, %s25
      %p29 = pneg %p23
      %p30 = scmp.eq.s32.totalorder %s14, 1
      %p31 = por %p29, %p30
      %p32 = scmp.ne.s32.totalorder %s24, %s27
      %p33 = scmp.eq.s32.totalorder %s14, 0
      %p34 = por %p32, %p33
      %p35 = scmp.ne.s32.totalorder %s24, %s27
      %p36 = scmp.eq.s32.totalorder %s19, 1
      %p37 = por %p35, %p36
      %p38 = scmp.ne.s32.totalorder %s27, %s28
      %p39 = scmp.eq.s32.totalorder %s19, 0
      %p40 = por %p38, %p39
      %p41 = scmp.ne.s32.totalorder %s27, %s28
      %p42 = scmp.eq.s32.totalorder %s20, 1
      %p43 = por %p41, %p42
      %p45 = scmp.ne.s32.totalorder %s28, %s44
      %p46 = scmp.eq.s32.totalorder %s20, 0
      %p47 = por %p45, %p46
      %s49 = sadd.s32 %s48, 1
      %p52 = scmp.eq.s32.totalorder %s14, 1
      %p53 = scmp.ne.s32.totalorder %s48, %s50
      %p54 = scmp.eq.s32.totalorder %s14, 0
      %p55 = por %p53, %p54
      %p56 = scmp.ne.s32.totalorder %s48, %s50
      %p57 = scmp.eq.s32.totalorder %s19, 1
      %p58 = por %p56, %p57
      %p59 = scmp.ne.s32.totalorder %s50, %s51
      %p60 = scmp.eq.s32.totalorder %s19, 0
      %p61 = por %p59, %p60
      %p62 = scmp.ne.s32.totalorder %s50, %s51
      %p63 = scmp.eq.s32.totalorder %s20, 1
      %p64 = por %p62, %p63
      %p66 = scmp.ne.s32.totalorder %s51, %s65
      %p67 = scmp.eq.s32.totalorder %s20, 0
      %p68 = por %p66, %p67
      %s70 = sadd.s32 %s69, 1
      %p73 = scmp.eq.s32.totalorder %s14, 1
      %p74 = scmp.ne.s32.totalorder %s69, %s71
      %p75 = scmp.eq.s32.totalorder %s14, 0
      %p76 = por %p74, %p75
      %p77 = scmp.ne.s32.totalorder %s69, %s71
      %p78 = scmp.eq.s32.totalorder %s19, 1
      %p79 = por %p77, %p78
      %p80 = scmp.ne.s32.totalorder %s71, %s72
      %p81 = scmp.eq.s32.totalorder %s19, 0
      %p82 = por %p80, %p81
      %p83 = scmp.ne.s32.totalorder %s71, %s72
      %p84 = scmp.eq.s32.totalorder %s20, 1
      %p85 = por %p83, %p84
      %p87 = scmp.ne.s32.totalorder %s72, %s86
      %p88 = scmp.eq.s32.totalorder %s20, 0
      %p89 = por %p87, %p88
      %s91 = sadd.s32 %s90, 1
      %p94 = scmp.eq.s32.totalorder %s14, 1
      %p95 = scmp.ne.s32.totalorder %s90, %s92
      %p96 = scmp.eq.s32.totalorder %s14, 0
      %p97 = por %p95, %p96
      %p98 = scmp.ne.s32.totalorder %s90, %s92
      %p99 = scmp.eq.s32.totalorder %s19, 1
      %p100 = por %p98, %p99
      %p101 = scmp.ne.s32.totalorder %s92, %s93
      %p102 = scmp.eq.s32.totalorder %s19, 0
      %p103 = por %p101, %p102
      %p104 = scmp.ne.s32.totalorder %s92, %s93
      %p105 = scmp.eq.s32.totalorder %s20, 1
      %p106 = por %p104, %p105
      %p108 = scmp.ne.s32.totalorder %s93, %s107
      %p109 = scmp.eq.s32.totalorder %s20, 0
      %p110 = por %p108, %p109
      %s112 = sadd.s32 %s111, 1
      %p115 = scmp.eq.s32.totalorder %s14, 1
      %p116 = scmp.ne.s32.totalorder %s111, %s113
      %p117 = scmp.eq.s32.totalorder %s14, 0
      %p118 = por %p116, %p117
      %p119 = scmp.ne.s32.totalorder %s111, %s113
      %p120 = scmp.eq.s32.totalorder %s19, 1
      %p121 = por %p119, %p120
      %p122 = scmp.ne.s32.totalorder %s113, %s114
      %p123 = scmp.eq.s32.totalorder %s19, 0
      %p124 = por %p122, %p123
      %p125 = scmp.ne.s32.totalorder %s113, %s114
      %p126 = scmp.eq.s32.totalorder %s20, 1
      %p127 = por %p125, %p126
      %p129 = scmp.ne.s32.totalorder %s114, %s128
      %p130 = scmp.eq.s32.totalorder %s20, 0
      %p131 = por %p129, %p130
      %s132 = ssub.s32 %s14, %s21
      %p133 = scmp.eq.s32.totalorder %s132, 0
      %s135 = sadd.s32 %s134, 1
      %s136 = scalar_select %p133, %s134, %s135
      %p139 = pneg %p133
      %p140 = scmp.eq.s32.totalorder %s14, 1
      %p141 = por %p139, %p140
      %p142 = scmp.ne.s32.totalorder %s134, %s137
      %p143 = scmp.eq.s32.totalorder %s14, 0
      %p144 = por %p142, %p143
      %p145 = scmp.ne.s32.totalorder %s134, %s137
      %p146 = scmp.eq.s32.totalorder %s19, 1
      %p147 = por %p145, %p146
      %p148 = scmp.ne.s32.totalorder %s137, %s138
      %p149 = scmp.eq.s32.totalorder %s19, 0
      %p150 = por %p148, %p149
      %p151 = scmp.ne.s32.totalorder %s137, %s138
      %p152 = scmp.eq.s32.totalorder %s20, 1
      %p153 = por %p151, %p152
      %p155 = scmp.ne.s32.totalorder %s138, %s154
      %p156 = scmp.eq.s32.totalorder %s20, 0
      %p157 = por %p155, %p156
      %p158 = scmp.le.s32.totalorder 1, %s14
      %p159 = scmp.lt.s32.totalorder %s14, 3
      %p160 = pnand %p158, %p159
      %p161 = pneg %p160
      // Predicated region
      $region9: #{tpu_custom_call.1} parent=5 // pred_check
        _
      $region10: #{tpu_custom_call.1} parent=5 // pred_check_branch
        %163 = sbr.rel (%p160) target = $region12
      $region11: #{tpu_custom_call.1} parent=5 // pred_region
        %s164 = ssub.s32 %s14, 1
        // Predicated region
        $region13: #{tpu_custom_call.1} parent=11 // pred_check
          %p165 = pneg %p61
        $region14: #{tpu_custom_call.1} parent=11 // pred_check_branch
          %167 = sbr.rel (%p165) target = $region16
        $region15: #{tpu_custom_call.1} parent=11 // pred_region
          _
        $region16: #{tpu_custom_call.1} parent=11 // pred_fallthru
          _
        // Predicated region
        $region17: #{tpu_custom_call.1} parent=11 // pred_check
          %p168 = pneg %p82
        $region18: #{tpu_custom_call.1} parent=11 // pred_check_branch
          %170 = sbr.rel (%p168) target = $region20
        $region19: #{tpu_custom_call.1} parent=11 // pred_region
          _
        $region20: #{tpu_custom_call.1} parent=11 // pred_fallthru
          _
        // Predicated region
        $region21: #{tpu_custom_call.1} parent=11 // pred_check
          %p171 = pneg %p103
        $region22: #{tpu_custom_call.1} parent=11 // pred_check_branch
          %173 = sbr.rel (%p171) target = $region24
        $region23: #{tpu_custom_call.1} parent=11 // pred_region
          _
        $region24: #{tpu_custom_call.1} parent=11 // pred_fallthru
          _
        // Predicated region
        $region25: #{tpu_custom_call.1} parent=11 // pred_check
          %p174 = pneg %p124
        $region26: #{tpu_custom_call.1} parent=11 // pred_check_branch
          %176 = sbr.rel (%p174) target = $region28
        $region27: #{tpu_custom_call.1} parent=11 // pred_region
          _
        $region28: #{tpu_custom_call.1} parent=11 // pred_fallthru
          _
      $region12: #{tpu_custom_call.1} parent=5 // pred_fallthru
        _
      %p177 = scmp.lt.s32.totalorder %s14, 2
      // Predicated region
      $region29: #{tpu_custom_call.1} parent=5 // pred_check
        %p178 = pneg %p177
      $region30: #{tpu_custom_call.1} parent=5 // pred_check_branch
        %180 = sbr.rel (%p178) target = $region32
      $region31: #{tpu_custom_call.1} parent=5 // pred_region
        // Predicated region
        $region33: #{tpu_custom_call.1} parent=31 // pred_check
          %p181 = pneg %p34
        $region34: #{tpu_custom_call.1} parent=31 // pred_check_branch
          %183 = sbr.rel (%p181) target = $region36
        $region35: #{tpu_custom_call.1} parent=31 // pred_region
          %p184 = scmp.lt.s32.totalorder %s14, 1
          %s185 = scalar_select %p184, %s14, 1
          %s186 = smul.addr %s185, 8
          %s187 = scalar_lea.vmem %s0, %s186
        $region36: #{tpu_custom_call.1} parent=31 // pred_fallthru
          _
      $region32: #{tpu_custom_call.1} parent=5 // pred_fallthru
        _
      %p188 = scmp.le.s32.totalorder 1, %s14
      %p189 = scmp.lt.s32.totalorder %s14, 3
      %p190 = pnand %p188, %p189
      %p191 = pneg %p190
      // Predicated region
      $region37: #{tpu_custom_call.1} parent=5 // pred_check
        _
      $region38: #{tpu_custom_call.1} parent=5 // pred_check_branch
        %193 = sbr.rel (%p190) target = $region40
      $region39: #{tpu_custom_call.1} parent=5 // pred_region
        %s194 = ssub.s32 %s14, 1
        %p195 = scmp.lt.s32.totalorder %s19, 1
        %s196 = scalar_select %p195, %s19, 1
        %s197 = smul.addr %s196, 8
        %s198 = scalar_lea.vmem %s0, %s197
        %p199 = pneg %p40
        %p200 = pneg %p37
        %p201 = pneg %p61
        %p202 = pneg %p58
        %p203 = pneg %p82
        %p204 = pneg %p79
        %p205 = pneg %p103
        %p206 = pneg %p100
        %p207 = pneg %p124
        %p208 = pneg %p121
        %p209 = pneg %p150
        %p210 = pneg %p147
        %s211 = sand.u32 %s137, 1
        %s212 = scalar_lea.sflag [#allocation3], %s211
        %s213 = sand.u32 %s137, 1
        %s214 = smul.addr %s213, 8
        %s215 = scalar_lea.vmem [#allocation2], %s214
        %p216 = scmp.lt.s32.totalorder %s19, 1
        %s217 = scalar_select %p216, %s19, 1
        %s218 = smul.addr %s217, 8
        %s219 = scalar_lea.vmem %s0, %s218
        %v220 = vld [vmem:[%s219] sm:$0xff]
        %v221 = vld [vmem:[%s1] sm:$0xff]
        %v222 = vld [vmem:[%s1 + $0x8] sm:$0xff]
        %v223 = vld [vmem:[%s1 + $0x10] sm:$0xff]
        %v224 = vld [vmem:[%s1 + $0x18] sm:$0xff]
        %v225 = vld [vmem:[%s2] sm:$0x1]
        %v227 = vlaneseq
        %v228 = vshrl.u32 %v227, 7
        %v229 = vsub.s32 0, %v228
        %v230 = vrot.slane %v225, %v229
        %vm232 = vcmask 261120
        %v234 = vsel %vm232, %v220, 0
        %236 = vmatprep.subr.mxu0 0.0
        %237 = vmatpush1.msra.mxu0 %v221
        %238 = vmatprep.subr.mxu0 0.0
        %239 = vmatpush1.msra.mxu0 %v222
        %240 = vmatprep.subr.mxu0 0.0
        %241 = vmatpush1.msra.mxu0 %v223
        %242 = vmatprep.subr.mxu0 0.0
        %243 = vmatpush1.msra.mxu0 %v224
        %244 = vmatprep.subr.mxu0 0.0
        %245 = vmatpush1.msra.mxu0 0.0
        %246 = vmatprep.subr.mxu0 0.0
        %247 = vmatpush1.msra.mxu0 0.0
        %248 = vmatprep.subr.mxu0 0.0
        %249 = vmatpush1.msra.mxu0 0.0
        %250 = vmatprep.subr.mxu0 0.0
        %251 = vmatpush1.msra.mxu0 0.0
        %252 = vmatprep.subr.mxu0 0.0
        %253 = vmatpush1.msra.mxu0 0.0
        %254 = vmatprep.subr.mxu0 0.0
        %255 = vmatpush1.msra.mxu0 0.0
        %256 = vmatprep.subr.mxu0 0.0
        %257 = vmatpush1.msra.mxu0 0.0
        %258 = vmatprep.subr.mxu0 0.0
        %259 = vmatpush1.msra.mxu0 0.0
        %260 = vmatprep.subr.mxu0 0.0
        %261 = vmatpush1.msra.mxu0 0.0
        %262 = vmatprep.subr.mxu0 0.0
        %263 = vmatpush1.msra.mxu0 0.0
        %264 = vmatprep.subr.mxu0 0.0
        %265 = vmatpush1.msra.mxu0 0.0
        %266 = vmatprep.subr.mxu0 0.0
        %267 = vmatpush1.msra.mxu0 0.0
        %268 = vmatprep.subr.mxu0 0.0
        %269 = vmatpush1.msra.mxu0 0.0
        %270 = vmatprep.subr.mxu0 0.0
        %271 = vmatpush1.msra.mxu0 0.0
        %272 = vmatprep.subr.mxu0 0.0
        %273 = vmatpush1.msra.mxu0 0.0
        %274 = vmatprep.subr.mxu0 0.0
        %275 = vmatpush1.msra.mxu0 0.0
        %276 = vmatprep.subr.mxu0 0.0
        %277 = vmatpush1.msra.mxu0 0.0
        %278 = vmatprep.subr.mxu0 0.0
        %279 = vmatpush1.msra.mxu0 0.0
        %280 = vmatprep.subr.mxu0 0.0
        %281 = vmatpush1.msra.mxu0 0.0
        %282 = vmatprep.subr.mxu0 0.0
        %283 = vmatpush1.msra.mxu0 0.0
        %284 = vmatprep.subr.mxu0 0.0
        %285 = vmatpush1.msra.mxu0 0.0
        %286 = vmatprep.subr.mxu0 0.0
        %287 = vmatpush1.msra.mxu0 0.0
        %288 = vmatprep.subr.mxu0 0.0
        %289 = vmatpush1.msra.mxu0 0.0
        %290 = vmatprep.subr.mxu0 0.0
        %291 = vmatpush1.msra.mxu0 0.0
        %292 = vmatprep.subr.mxu0 0.0
        %293 = vmatpush1.msra.mxu0 0.0
        %294 = vmatprep.subr.mxu0 0.0
        %295 = vmatpush1.msra.mxu0 0.0
        %296 = vmatprep.subr.mxu0 0.0
        %297 = vmatpush1.msra.mxu0 0.0
        %298 = vmatprep.subr.mxu0 0.0
        %299 = vmatpush1.msra.mxu0 0.0
        %300 = vmatprep.mubr.f32.mxu0 0.0
        %301 = vmatmul.mubr.f32.gmra.mrb[0].mxu0 %v234
        %v302 = vpop.f32.mrb[0].mxu0
        %v303 = vadd.f32 %v230, %v302
        %v304 = vpop.f32.mrb[0].mxu0
        %305 = vdwg.mxu0
        %v306 = vmax.f32 %v303, 0.0
        %v307 = vld [vmem:[%s3] sm:$0xff]
        %v308 = vld [vmem:[%s3 + $0x8] sm:$0xff]
        %v309 = vld [vmem:[%s3 + $0x10] sm:$0xff]
        %v310 = vld [vmem:[%s3 + $0x18] sm:$0xff]
        %v311 = vld [vmem:[%s3 + $0x20] sm:$0xff]
        %v312 = vld [vmem:[%s3 + $0x28] sm:$0xff]
        %v313 = vld [vmem:[%s3 + $0x30] sm:$0xff]
        %v314 = vld [vmem:[%s3 + $0x38] sm:$0xff]
        %v315 = vld [vmem:[%s3 + $0x40] sm:$0xff]
        %v316 = vld [vmem:[%s3 + $0x48] sm:$0xff]
        %v317 = vld [vmem:[%s3 + $0x50] sm:$0xff]
        %v318 = vld [vmem:[%s3 + $0x58] sm:$0xff]
        %v319 = vld [vmem:[%s3 + $0x60] sm:$0xff]
        %v320 = vld [vmem:[%s3 + $0x68] sm:$0xff]
        %v321 = vld [vmem:[%s3 + $0x70] sm:$0xff]
        %v322 = vld [vmem:[%s3 + $0x78] sm:$0xff]
        %v323 = vld [vmem:[%s4] sm:$0x1]
        %v325 = vlaneseq
        %v326 = vshrl.u32 %v325, 7
        %v327 = vsub.s32 0, %v326
        %v328 = vrot.slane %v323, %v327
        %330 = vmatprep.subr.mxu0 0.0
        %331 = vmatpush1.msra.mxu0 %v307
        %332 = vmatprep.subr.mxu0 0.0
        %333 = vmatpush1.msra.mxu0 %v308
        %334 = vmatprep.subr.mxu0 0.0
        %335 = vmatpush1.msra.mxu0 %v309
        %336 = vmatprep.subr.mxu0 0.0
        %337 = vmatpush1.msra.mxu0 %v310
        %338 = vmatprep.subr.mxu0 0.0
        %339 = vmatpush1.msra.mxu0 %v311
        %340 = vmatprep.subr.mxu0 0.0
        %341 = vmatpush1.msra.mxu0 %v312
        %342 = vmatprep.subr.mxu0 0.0
        %343 = vmatpush1.msra.mxu0 %v313
        %344 = vmatprep.subr.mxu0 0.0
        %345 = vmatpush1.msra.mxu0 %v314
        %346 = vmatprep.subr.mxu0 0.0
        %347 = vmatpush1.msra.mxu0 %v315
        %348 = vmatprep.subr.mxu0 0.0
        %349 = vmatpush1.msra.mxu0 %v316
        %350 = vmatprep.subr.mxu0 0.0
        %351 = vmatpush1.msra.mxu0 %v317
        %352 = vmatprep.subr.mxu0 0.0
        %353 = vmatpush1.msra.mxu0 %v318
        %354 = vmatprep.subr.mxu0 0.0
        %355 = vmatpush1.msra.mxu0 %v319
        %356 = vmatprep.subr.mxu0 0.0
        %357 = vmatpush1.msra.mxu0 %v320
        %358 = vmatprep.subr.mxu0 0.0
        %359 = vmatpush1.msra.mxu0 %v321
        %360 = vmatprep.subr.mxu0 0.0
        %361 = vmatpush1.msra.mxu0 %v322
        %362 = vmatprep.subr.mxu0 0.0
        %363 = vmatpush1.msra.mxu0 0.0
        %364 = vmatprep.subr.mxu0 0.0
        %365 = vmatpush1.msra.mxu0 0.0
        %366 = vmatprep.subr.mxu0 0.0
        %367 = vmatpush1.msra.mxu0 0.0
        %368 = vmatprep.subr.mxu0 0.0
        %369 = vmatpush1.msra.mxu0 0.0
        %370 = vmatprep.subr.mxu0 0.0
        %371 = vmatpush1.msra.mxu0 0.0
        %372 = vmatprep.subr.mxu0 0.0
        %373 = vmatpush1.msra.mxu0 0.0
        %374 = vmatprep.subr.mxu0 0.0
        %375 = vmatpush1.msra.mxu0 0.0
        %376 = vmatprep.subr.mxu0 0.0
        %377 = vmatpush1.msra.mxu0 0.0
        %378 = vmatprep.subr.mxu0 0.0
        %379 = vmatpush1.msra.mxu0 0.0
        %380 = vmatprep.subr.mxu0 0.0
        %381 = vmatpush1.msra.mxu0 0.0
        %382 = vmatprep.subr.mxu0 0.0
        %383 = vmatpush1.msra.mxu0 0.0
        %384 = vmatprep.subr.mxu0 0.0
        %385 = vmatpush1.msra.mxu0 0.0
        %386 = vmatprep.subr.mxu0 0.0
        %387 = vmatpush1.msra.mxu0 0.0
        %388 = vmatprep.subr.mxu0 0.0
        %389 = vmatpush1.msra.mxu0 0.0
        %390 = vmatprep.subr.mxu0 0.0
        %391 = vmatpush1.msra.mxu0 0.0
        %392 = vmatprep.subr.mxu0 0.0
        %393 = vmatpush1.msra.mxu0 0.0
        %394 = vmatprep.mubr.f32.mxu0 0.0
        %395 = vmatmul.mubr.f32.gmra.mrb[0].mxu0 %v306
        %v396 = vpop.f32.mrb[0].mxu0
        %v397 = vadd.f32 %v328, %v396
        %v398 = vpop.f32.mrb[0].mxu0
        %399 = vdwg.mxu0
        %v400 = vadd.f32 %v220, %v397
        %401 = vst.msk [vmem:[%s215] sm:$0xff] %vm232, %v400
        %s402 = sand.u32 %s137, 1
        %s403 = scalar_lea.sflag [#allocation3], %s402
        %s404 = sand.u32 %s137, 1
        %s405 = smul.addr %s404, 8
        %s406 = scalar_lea.vmem [#allocation2], %s405
        // Predicated region
        $region41: #{tpu_custom_call.1} parent=39 // pred_check
          %p407 = pneg %p147
        $region42: #{tpu_custom_call.1} parent=39 // pred_check_branch
          %409 = sbr.rel (%p407) target = $region44
        $region43: #{tpu_custom_call.1} parent=39 // pred_region
          %s411 = ssub.s32 128, 128
          %412 = vsyncadd %s403, %s411
          %s413 = smul.addr %s19, 128
          %s414 = scalar_lea.hbm %s5, %s413
          %s416 = sshll.u32 %s406, 4
          %s417 = int_to_ptr.vmem [resolvable:$true] %s416
          %419 = dma.vmem_to_hbm [thread:$0]  %s417, 128, %s414, %s403
        $region44: #{tpu_custom_call.1} parent=39 // pred_fallthru
          _
      $region40: #{tpu_custom_call.1} parent=5 // pred_fallthru
        _
      %p420 = scmp.le.s32.totalorder 2, %s14
      // Predicated region
      $region45: #{tpu_custom_call.1} parent=5 // pred_check
        %p421 = pneg %p420
      $region46: #{tpu_custom_call.1} parent=5 // pred_check_branch
        %423 = sbr.rel (%p421) target = $region48
      $region47: #{tpu_custom_call.1} parent=5 // pred_region
        %s424 = ssub.s32 %s14, 2
        // Predicated region
        $region49: #{tpu_custom_call.1} parent=47 // pred_check
          %p425 = pneg %p153
        $region50: #{tpu_custom_call.1} parent=47 // pred_check_branch
          %427 = sbr.rel (%p425) target = $region52
        $region51: #{tpu_custom_call.1} parent=47 // pred_region
          %s428 = sand.u32 %s138, 1
          %s429 = scalar_lea.sflag [#allocation3], %s428
          %s430 = sand.u32 %s138, 1
          %s431 = smul.addr %s430, 8
          %s432 = scalar_lea.vmem [#allocation2], %s431
          %433 = dma.done %s429, 128
        $region52: #{tpu_custom_call.1} parent=47 // pred_fallthru
          _
      $region48: #{tpu_custom_call.1} parent=5 // pred_fallthru
        _
    $region6: #{tpu_custom_call.1} parent=1 // loop_footer
      %s18 = sadd.s32 1, %s14
    $region7: #{tpu_custom_call.1} parent=1 // loop_footer_branch
      %13 = sbr.rel target = $region3
    $region8: #{tpu_custom_call.1} parent=1 // loop_exit
      _
    %434 = vsyncpa [#allocation3], 1
    %s435 = scalar_lea.sflag [#allocation3], 1
    %436 = vsyncpa %s435, 1

</llo_original>
